<compile_context>
chip_gen: v7x
topology: tpu7x:2x2x1
jax: 0.10.0
libtpu: 0.0.40
codegen_flags: <defaults>
</compile_context>

<pallas_src>
import jax
import jax.numpy as jnp
from jax.experimental import pallas as pl
from jax.experimental.pallas import tpu as pltpu

_LANE = 128
_PREFERRED_WIDTH = 8192                  # lane width for flattened (lane-dense) views
_MAX_TARGET_BLOCK = 8 * 1024 * 1024      # ~8 MiB blocks (4x residency = 32 MiB)
_MIN_TARGET_BLOCK = 1 * 1024 * 1024
_TWO_CORE_SPLIT_BYTES = 4 * 1024 * 1024  # split rows so both v7x TCs stream


def _linreg_kernel(w_ref, b_ref, x_ref, o_ref):
    # w_ref / b_ref: shape-(1,) scalars in SMEM; x_ref / o_ref: VMEM tiles.
    o_ref[...] = w_ref[0] * x_ref[...] + b_ref[0]


def _sublane(itemsize):
    # (8,128) tiles for 32-bit, (16,128) for 16-bit, (32,128) for 8-bit dtypes.
    return max(8, 32 // max(itemsize, 1))


def _vmem_capacity_bytes():
    try:
        return int(pltpu.get_tpu_info().vmem_capacity_bytes)
    except Exception:
        return 64 * 1024 * 1024          # conservative (v7x-sized) fallback


def _lane_dense_2d(x):
    """Present x as a lane-dense (rows, W) slab with W a multiple of 128.

    Returns (x2, pad) where pad is the number of trailing padding elements
    appended to the flattened array (0 when no padding copy was needed).
    """
    if x.ndim >= 2 and x.shape[-1] >= _LANE and x.shape[-1] % _LANE == 0:
        return x.reshape(-1, x.shape[-1]), 0
    flat = x.reshape(-1)
    total = flat.shape[0]
    # Prefer a width that divides the element count exactly (no padding copy).
    for w in (8192, 4096, 2048, 1024, 512, 256, 128):
        if total % w == 0 and total >= w:
            return flat.reshape(total // w, w), 0
    w = min(_PREFERRED_WIDTH, pl.cdiv(total, _LANE) * _LANE)
    pad = (-total) % w
    flat = jnp.pad(flat, (0, pad))
    return flat.reshape(-1, w), pad


def _choose_block(rows, cols, itemsize, target_bytes):
    """Pick a large lane-dense block obeying dtype-aware (sublane, 128) tiling."""
    sub = _sublane(itemsize)
    if cols * itemsize * sub <= target_bytes:
        bc = cols                                   # full width: one contiguous HBM slab
    else:
        bc = max(_LANE, (target_bytes // (sub * itemsize) // _LANE) * _LANE)
    br = max(sub, (target_bytes // max(bc * itemsize, 1) // sub) * sub)
    if br >= rows:
        br = rows                                   # full height: always legal
    # v7x has 2 TensorCores: if a large slab collapsed into a single row block,
    # split it so the "parallel" row axis has >= 2 blocks.
    if br == rows and rows >= 2 * sub and rows * bc * itemsize >= _TWO_CORE_SPLIT_BYTES:
        half = ((pl.cdiv(rows, 2) + sub - 1) // sub) * sub
        br = min(rows, max(sub, half))
    return br, bc


def linear_regression_forward(x, weight, bias, *, target_block_bytes=None):
    """y = weight * x + bias with scalar broadcast (matches the PyTorch module)."""
    x = jnp.asarray(x)
    if x.size == 0:
        return x
    weight = jnp.asarray(weight, dtype=x.dtype).reshape(1)
    bias = jnp.asarray(bias, dtype=x.dtype).reshape(1)

    orig_shape = x.shape
    x2, pad = _lane_dense_2d(x)
    rows, cols = x2.shape
    itemsize = x2.dtype.itemsize

    if target_block_bytes is None:
        vmem_cap = _vmem_capacity_bytes()
        target_block_bytes = min(_MAX_TARGET_BLOCK, max(_MIN_TARGET_BLOCK, vmem_cap // 8))
    br, bc = _choose_block(rows, cols, itemsize, int(target_block_bytes))

    grid = (pl.cdiv(rows, br), pl.cdiv(cols, bc))   # ragged edges handled by Pallas

    # VMEM budget from the actual footprint: double-buffered input + output
    # blocks plus margin for compiler scratch (never below the common default).
    block_bytes = br * bc * itemsize
    vmem_limit = int(max(4 * block_bytes + (2 << 20), 16 << 20))

    y2 = pl.pallas_call(
        _linreg_kernel,
        out_shape=jax.ShapeDtypeStruct((rows, cols), x2.dtype),
        grid=grid,
        in_specs=[
            pl.BlockSpec(memory_space=pltpu.SMEM),          # weight, shape (1,)
            pl.BlockSpec(memory_space=pltpu.SMEM),          # bias,   shape (1,)
            pl.BlockSpec((br, bc), lambda i, j: (i, j)),    # x tile
        ],
        out_specs=pl.BlockSpec((br, bc), lambda i, j: (i, j)),
        compiler_params=pltpu.CompilerParams(
            dimension_semantics=("parallel", "parallel"),   # megacore sharding on v7x
            vmem_limit_bytes=vmem_limit,
        ),
    )(weight, bias, x2)

    if pad:
        return y2.reshape(-1)[: x.size].reshape(orig_shape)
    return y2.reshape(orig_shape)


if __name__ == "__main__":
    key = jax.random.PRNGKey(0)
    k_w, k_b, k_x1, k_x2, k_x3, k_x4 = jax.random.split(key, 6)

    # Deterministic init mirroring torch.rand(1) (uniform [0,1), shape (1,), f32).
    weight = jax.random.uniform(k_w, (1,), dtype=jnp.float32)
    bias = jax.random.uniform(k_b, (1,), dtype=jnp.float32)

    def ref(x):
        return weight[0] * x + bias[0]

    # 1) Canonical linear-regression input (N, 1): exercises the lane-dense
    #    flatten + pad path (previously 1-lane masked stores).
    x1 = jax.random.normal(k_x1, (16, 1), dtype=jnp.float32)
    y1 = jax.block_until_ready(linear_regression_forward(x1, weight, bias))
    assert y1.shape == x1.shape and y1.dtype == x1.dtype
    assert jnp.allclose(y1, ref(x1), atol=1e-6), "mismatch vs reference (N,1)"

    # 2) Already lane-dense 2-D input (last dim a multiple of 128): full-width block.
    x2 = jax.random.normal(k_x2, (200, 384), dtype=jnp.float32)
    y2 = jax.block_until_ready(linear_regression_forward(x2, weight, bias))
    assert jnp.allclose(y2, ref(x2), atol=1e-6), "mismatch vs reference (2D lane-dense)"

    # 3) 1-D ragged input: flatten + pad-to-128 path, trailing pad stripped.
    x3 = jax.random.normal(k_x3, (77,), dtype=jnp.float32)
    y3 = jax.block_until_ready(linear_regression_forward(x3, weight, bias))
    assert y3.shape == x3.shape
    assert jnp.allclose(y3, ref(x3), atol=1e-6), "mismatch vs reference (1D ragged)"

    # 4) Force a small block target to exercise the multi-block tiled grid
    #    (grid (8, 1)) and cdiv edge handling.
    x4 = jax.random.normal(k_x4, (64, 256), dtype=jnp.float32)
    y4 = jax.block_until_ready(
        linear_regression_forward(x4, weight, bias, target_block_bytes=8 * 256 * 4)
    )
    assert jnp.allclose(y4, ref(x4), atol=1e-6), "mismatch vs reference (tiled grid)"

    print("KERNEL_OK")
</pallas_src>

<mosaic_0001>
module attributes {stable_mosaic.version = 11 : i64} {
  func.func @_linreg_kernel(%arg0: i32, %arg1: i32, %arg2: memref<1xf32, #tpu.memory_space<smem>>, %arg3: memref<1xf32, #tpu.memory_space<smem>>, %arg4: memref<1x128xf32, #tpu.memory_space<vmem>>, %arg5: memref<1x128xf32, #tpu.memory_space<vmem>>) attributes {dimension_semantics = [#tpu.dimension_semantics<parallel>, #tpu.dimension_semantics<parallel>], iteration_bounds = array<i64: 1, 1>, scalar_prefetch = 0 : i64, scratch_operands = 0 : i64, tpu.core_type = #tpu.core_type<tc>, window_params = [{transform_indices = @transform_0, window_bounds = array<i64: 1>}, {transform_indices = @transform_1, window_bounds = array<i64: 1>}, {transform_indices = @transform_2, window_bounds = array<i64: 1, 128>}, {transform_indices = @transform_3, window_bounds = array<i64: 1, 128>}]} {
    %c0 = arith.constant 0 : index
    %0 = memref.load %arg2[%c0] : memref<1xf32, #tpu.memory_space<smem>>
    %c0_0 = arith.constant 0 : index
    %c0_1 = arith.constant 0 : index
    %1 = vector.load %arg4[%c0_0, %c0_1] : memref<1x128xf32, #tpu.memory_space<vmem>>, vector<1x128xf32>
    %2 = vector.broadcast %0 : f32 to vector<1x128xf32>
    %3 = arith.mulf %2, %1 : vector<1x128xf32>
    %c0_2 = arith.constant 0 : index
    %4 = memref.load %arg3[%c0_2] : memref<1xf32, #tpu.memory_space<smem>>
    %5 = vector.broadcast %4 : f32 to vector<1x128xf32>
    %6 = arith.addf %3, %5 : vector<1x128xf32>
    %c0_3 = arith.constant 0 : index
    %c0_4 = arith.constant 0 : index
    %7 = vector.load %arg5[%c0_3, %c0_4] : memref<1x128xf32, #tpu.memory_space<vmem>>, vector<1x128xf32>
    tpu.vector_store %arg5[%c0_3, %c0_4], %6 {strides = array<i32>} : memref<1x128xf32, #tpu.memory_space<vmem>>, vector<1x128xf32>,
    return
  }
  func.func @transform_0(%arg0: i32, %arg1: i32) -> i32 {
    %c0_i32 = arith.constant 0 : i32
    %c0_i32_0 = arith.constant 0 : i32
    return %c0_i32 : i32
  }
  func.func @transform_1(%arg0: i32, %arg1: i32) -> i32 {
    %c0_i32 = arith.constant 0 : i32
    %c0_i32_0 = arith.constant 0 : i32
    return %c0_i32 : i32
  }
  func.func @transform_2(%arg0: i32, %arg1: i32) -> (i32, i32) {
    %c0_i32 = arith.constant 0 : i32
    return %arg0, %arg1 : i32, i32
  }
  func.func @transform_3(%arg0: i32, %arg1: i32) -> (i32, i32) {
    %c0_i32 = arith.constant 0 : i32
    return %arg0, %arg1 : i32, i32
  }
}

</mosaic_0001>

<llo_original>
// kernel: tpu_custom_call.1
$region0: #{tpu_custom_call.1}
  #allocation0 [shape = 'u32[]', space=smem, size = 0x4, offset = 0x4, fixed_abs, tag = 'smem constant byte address 0x4 - core index']
  #allocation1 [shape = 'u32[144,128]{1,0:T(1,128)}', space=vmem, size = 0x12000, scoped, tag = 'internal scratch']
  #allocation2 [shape = 'f32[1]{0:T(128)S(6)}', space=smem, size = 0x200, scoped, tag = 'scoped memory for tpu_custom_call.1']
  #allocation3 [shape = 'f32[1]{0:T(128)S(6)}', space=smem, size = 0x200, scoped, tag = 'scoped memory for tpu_custom_call.1']
  %s0 = inlined_call_operand.<no memory space> [shape: f32[1], index: 0, kind: input, shape index: {}]
  %s1 = inlined_call_operand.<no memory space> [shape: f32[1], index: 1, kind: input, shape index: {}]
  %s2 = inlined_call_operand.vmem [shape: f32[1,128], index: 2, kind: input, shape index: {}]
  %s3 = inlined_call_operand.hbm [shape: f32[1,128], index: 3, kind: output, shape index: {}]
  %s4 = sld [smem:[#allocation0]]
  $region22: #{tpu_custom_call.1} parent=0
    _
  %s6 = ssub.s32 1, %s4
  %s7 = scalar_select 0, %s6, %s4
  %8 = sst [smem:[#allocation2]] %s0
  %9 = sst [smem:[#allocation3]] %s1
  $region1: #{tpu_custom_call.1} parent=0
    #allocation4 [shape = 'u8[512]{0}', space=vmem, size = 0x400, scoped, tag = 'output window, operand 0, single buffered']
    #allocation5 [shape = 's32[1]{0}', space=sflag, size = 0x4, scoped, tag = 'scoped memory for tpu_custom_call.1']
    %10 = vsyncpa [#allocation5], 0
    // Predicated region
    $region2: #{tpu_custom_call.1} parent=1 // pred_check
      _
    $region3: #{tpu_custom_call.1} parent=1 // pred_check_branch
      %12 = sbr.rel (0) target = $region5
    $region4: #{tpu_custom_call.1} parent=1 // pred_region
      _
    $region5: #{tpu_custom_call.1} parent=1 // pred_fallthru
      _
    // Predicated region
    $region6: #{tpu_custom_call.1} parent=1 // pred_check
      _
    $region7: #{tpu_custom_call.1} parent=1 // pred_check_branch
      %14 = sbr.rel (0) target = $region9
    $region8: #{tpu_custom_call.1} parent=1 // pred_region
      _
    $region9: #{tpu_custom_call.1} parent=1 // pred_fallthru
      _
    // Predicated region
    $region10: #{tpu_custom_call.1} parent=1 // pred_check
      _
    $region11: #{tpu_custom_call.1} parent=1 // pred_check_branch
      %16 = sbr.rel (0) target = $region13
    $region12: #{tpu_custom_call.1} parent=1 // pred_region
      _
    $region13: #{tpu_custom_call.1} parent=1 // pred_fallthru
      _
    %s17 = sld [smem:[#allocation2]]
    %v18 = vld [vmem:[%s2] sm:$0x1]
    %v19 = vstv %s17
    %v20 = vmul.f32 %v19, %v18
    %s21 = sld [smem:[#allocation3]]
    %v22 = vstv %s21
    %v23 = vadd.f32 %v20, %v22
    %24 = vst [vmem:[#allocation4] sm:$0x1] %v23
    // Predicated region
    $region14: #{tpu_custom_call.1} parent=1 // pred_check
      _
    $region15: #{tpu_custom_call.1} parent=1 // pred_check_branch
      %26 = sbr.rel (0) target = $region17
    $region16: #{tpu_custom_call.1} parent=1 // pred_region
      %s28 = ssub.s32 16, 16
      %29 = vsyncadd [#allocation5], %s28
      %s31 = sshll.u32 [#allocation4], 4
      %s32 = int_to_ptr.vmem [resolvable:$true] %s31
      %34 = dma.vmem_to_hbm [thread:$0]  %s32, 16, %s3, [#allocation5]
    $region17: #{tpu_custom_call.1} parent=1 // pred_fallthru
      _
    // Predicated region
    $region18: #{tpu_custom_call.1} parent=1 // pred_check
      _
    $region19: #{tpu_custom_call.1} parent=1 // pred_check_branch
      %36 = sbr.rel (0) target = $region21
    $region20: #{tpu_custom_call.1} parent=1 // pred_region
      %37 = dma.done [#allocation5], 16
    $region21: #{tpu_custom_call.1} parent=1 // pred_fallthru
      _
    %38 = vsyncpa [#allocation5], 1

</llo_original>
